<compile_context>
chip_gen: v5e
topology: v5e:2x2
jax: 0.10.0
libtpu: 0.0.40
codegen_flags: <defaults>
</compile_context>

<pallas_src>
import jax
import jax.numpy as jnp
from jax.experimental import pallas as pl
from jax.experimental.pallas import tpu as pltpu

IN_FEATURES = 28 * 28        # 784
H1, H2, N_OUT = 128, 64, 10

# Lane-dense padded sizes (multiples of 128).
K1_PAD = 896                 # 7 * 128  (layer-1 contraction dim, padded in-kernel)
H2_PAD = 128                 # hidden-2 width padded 64 -> 128
N_OUT_PAD = 128              # logits width padded 10 -> 128


def mlp_kernel(x_ref, w1_ref, b1_ref, w2_ref, b2_ref, w3_ref, b3_ref, o_ref, xs_ref):
    tb = x_ref.shape[0]

    # Stage the f32 x tile into a zero-padded, lane-aligned bf16 buffer (784 -> 896 lanes).
    # Zero the tail lanes every step (cheap, and correct under megacore "parallel" splitting),
    # then write the casted payload.  Layer-1 matmul then sees fully aligned operands.
    xs_ref[:, K1_PAD - 128:] = jnp.zeros((tb, 128), jnp.bfloat16)
    xs_ref[:, :IN_FEATURES] = x_ref[...].astype(jnp.bfloat16)

    # Layer 1: (tb, 896)bf16 @ (896, 128)bf16 -> f32 acc, +bias, ReLU, back to bf16.
    h1 = jnp.dot(xs_ref[...], w1_ref[...], preferred_element_type=jnp.float32)
    h1 = jnp.maximum(h1 + b1_ref[...], 0.0).astype(jnp.bfloat16)
    # Layer 2: (tb, 128) @ (128, 128) (cols 64..127 zero-padded -> ReLU keeps them 0).
    h2 = jnp.dot(h1, w2_ref[...], preferred_element_type=jnp.float32)
    h2 = jnp.maximum(h2 + b2_ref[...], 0.0).astype(jnp.bfloat16)
    # Layer 3: (tb, 128) @ (128, 128); only the first 10 output lanes are meaningful.
    h3 = jnp.dot(h2, w3_ref[...], preferred_element_type=jnp.float32)
    o_ref[...] = (h3 + b3_ref[...]).astype(o_ref.dtype)


def _round_up(n, m):
    return (n + m - 1) // m * m


def _pad2d(a, rows, cols, dtype):
    r, c = a.shape
    return jnp.pad(a, ((0, rows - r), (0, cols - c))).astype(dtype)


def simple_mlp_forward(x, params, *, tile_b=512):
    """x: (B, 1, 28, 28) or (B, 784). Returns (B, 10) f32 logits."""
    w1, b1, w2, b2, w3, b3 = params   # (784,128),(1,128),(128,64),(1,64),(64,10),(1,10)
    x2d = x.reshape(-1, IN_FEATURES).astype(jnp.float32)
    B = x2d.shape[0]

    # Batch tile: multiple of 8 sublanes.  Only tiny batches ever get row-padded; for large B
    # the last (possibly partial) block is handled by Pallas (OOB rows are not written back).
    tb = min(tile_b, _round_up(B, 8))
    if tb > B:
        x2d = jnp.pad(x2d, ((0, tb - B), (0, 0)))
    Bp = x2d.shape[0]
    grid_b = pl.cdiv(Bp, tb)

    # Tiny, VMEM-resident weights: bf16, zero-padded to lane-dense shapes (exact padding).
    w1_p = _pad2d(w1, K1_PAD, H1, jnp.bfloat16)
    b1_p = b1.astype(jnp.float32)
    w2_p = _pad2d(w2, H1, H2_PAD, jnp.bfloat16)
    b2_p = _pad2d(b2, 1, H2_PAD, jnp.float32)
    w3_p = _pad2d(w3, H2_PAD, N_OUT_PAD, jnp.bfloat16)
    b3_p = _pad2d(b3, 1, N_OUT_PAD, jnp.float32)

    resident = lambda shape: pl.BlockSpec(shape, lambda i: (0, 0))

    flops = 2 * Bp * (K1_PAD * H1 + H1 * H2_PAD + H2_PAD * N_OUT_PAD)
    bytes_accessed = (
        x2d.size * 4
        + (w1_p.size + w2_p.size + w3_p.size) * 2
        + (b1_p.size + b2_p.size + b3_p.size) * 4
        + Bp * N_OUT_PAD * 4
    )

    out = pl.pallas_call(
        mlp_kernel,
        out_shape=jax.ShapeDtypeStruct((Bp, N_OUT_PAD), jnp.float32),
        grid_spec=pltpu.PrefetchScalarGridSpec(
            num_scalar_prefetch=0,
            grid=(grid_b,),
            in_specs=[
                pl.BlockSpec((tb, IN_FEATURES), lambda i: (i, 0)),  # x tile: pipelined over batch
                resident((K1_PAD, H1)),                             # w1 stays in VMEM
                resident((1, H1)),                                  # b1
                resident((H1, H2_PAD)),                             # w2
                resident((1, H2_PAD)),                              # b2
                resident((H2_PAD, N_OUT_PAD)),                      # w3
                resident((1, N_OUT_PAD)),                           # b3
            ],
            out_specs=pl.BlockSpec((tb, N_OUT_PAD), lambda i: (i, 0)),
            scratch_shapes=[pltpu.VMEM((tb, K1_PAD), jnp.bfloat16)],  # lane-aligned x staging
        ),
        compiler_params=pltpu.CompilerParams(
            dimension_semantics=("parallel",),
        ),
        cost_estimate=pl.CostEstimate(
            flops=flops, transcendentals=0, bytes_accessed=bytes_accessed),
    )(x2d, w1_p, b1_p, w2_p, b2_p, w3_p, b3_p)

    return out[:B, :N_OUT]


def init_params(key):
    """Deterministic init mimicking nn.Linear's U(-1/sqrt(fan_in), 1/sqrt(fan_in)).

    Weights are stored as (in_features, out_features), i.e. the transpose of PyTorch's
    nn.Linear weight layout (out, in); the kernel computes x @ W + b.
    """
    dims = [(IN_FEATURES, H1), (H1, H2), (H2, N_OUT)]
    params = []
    for i, (fan_in, fan_out) in enumerate(dims):
        kw, kb = jax.random.split(jax.random.fold_in(key, i))
        bound = 1.0 / jnp.sqrt(float(fan_in))
        w = jax.random.uniform(kw, (fan_in, fan_out), jnp.float32, -bound, bound)
        b = jax.random.uniform(kb, (1, fan_out), jnp.float32, -bound, bound)
        params += [w, b]
    return tuple(params)


def reference_forward(x, params):
    w1, b1, w2, b2, w3, b3 = params
    x2d = x.reshape(-1, IN_FEATURES).astype(jnp.float32)
    h1 = jnp.maximum(x2d @ w1 + b1, 0.0)
    h2 = jnp.maximum(h1 @ w2 + b2, 0.0)
    return h2 @ w3 + b3


if __name__ == "__main__":
    key = jax.random.PRNGKey(0)
    params = init_params(key)
    # Small MNIST-like batch: (B=8, C=1, H=28, W=28) in NCHW.
    x = jax.random.normal(jax.random.fold_in(key, 100), (8, 1, 28, 28), jnp.float32)

    fwd = jax.jit(simple_mlp_forward)
    out = jax.block_until_ready(fwd(x, params))

    ref = reference_forward(x, params)
    assert out.shape == (8, 10), out.shape
    # bf16 weights/activations (f32 accumulation) -> loose tolerance vs. the f32 reference.
    assert jnp.allclose(out, ref, atol=2e-2, rtol=2e-2), (
        "mismatch vs reference, max abs diff = %s" % float(jnp.max(jnp.abs(out - ref))))

    print("KERNEL_OK")
</pallas_src>

<mosaic_0001>
module attributes {stable_mosaic.version = 11 : i64} {
  func.func @mlp_kernel(%arg0: i32, %arg1: memref<8x784xf32, #tpu.memory_space<vmem>>, %arg2: memref<896x128xbf16, #tpu.memory_space<vmem>>, %arg3: memref<1x128xf32, #tpu.memory_space<vmem>>, %arg4: memref<128x128xbf16, #tpu.memory_space<vmem>>, %arg5: memref<1x128xf32, #tpu.memory_space<vmem>>, %arg6: memref<128x128xbf16, #tpu.memory_space<vmem>>, %arg7: memref<1x128xf32, #tpu.memory_space<vmem>>, %arg8: memref<8x128xf32, #tpu.memory_space<vmem>>, %arg9: memref<8x896xbf16, #tpu.memory_space<vmem>>) attributes {dimension_semantics = [#tpu.dimension_semantics<parallel>], iteration_bounds = array<i64: 1>, scalar_prefetch = 0 : i64, scratch_operands = 1 : i64, tpu.core_type = #tpu.core_type<tc>, window_params = [{transform_indices = @transform_0, window_bounds = array<i64: 8, 784>}, {pipeline_mode = #tpu.pipeline_mode<synchronous>, transform_indices = @transform_1, window_bounds = array<i64: 896, 128>}, {pipeline_mode = #tpu.pipeline_mode<synchronous>, transform_indices = @transform_2, window_bounds = array<i64: 1, 128>}, {pipeline_mode = #tpu.pipeline_mode<synchronous>, transform_indices = @transform_3, window_bounds = array<i64: 128, 128>}, {pipeline_mode = #tpu.pipeline_mode<synchronous>, transform_indices = @transform_4, window_bounds = array<i64: 1, 128>}, {pipeline_mode = #tpu.pipeline_mode<synchronous>, transform_indices = @transform_5, window_bounds = array<i64: 128, 128>}, {pipeline_mode = #tpu.pipeline_mode<synchronous>, transform_indices = @transform_6, window_bounds = array<i64: 1, 128>}, {transform_indices = @transform_7, window_bounds = array<i64: 8, 128>}]} {
    %cst = arith.constant 0.000000e+00 : bf16
    %0 = vector.broadcast %cst : bf16 to vector<8x128xbf16>
    %c0 = arith.constant 0 : index
    %c768 = arith.constant 768 : index
    %1 = vector.load %arg9[%c0, %c768] : memref<8x896xbf16, #tpu.memory_space<vmem>>, vector<8x128xbf16>
    tpu.vector_store %arg9[%c0, %c768], %0 {strides = array<i32>} : memref<8x896xbf16, #tpu.memory_space<vmem>>, vector<8x128xbf16>,
    %c0_0 = arith.constant 0 : index
    %c0_1 = arith.constant 0 : index
    %2 = vector.load %arg1[%c0_0, %c0_1] : memref<8x784xf32, #tpu.memory_space<vmem>>, vector<8x784xf32>
    %3 = arith.truncf %2 : vector<8x784xf32> to vector<8x784xbf16>
    %c0_2 = arith.constant 0 : index
    %c0_3 = arith.constant 0 : index
    %4 = vector.load %arg9[%c0_2, %c0_3] : memref<8x896xbf16, #tpu.memory_space<vmem>>, vector<8x784xbf16>
    tpu.vector_store %arg9[%c0_2, %c0_3], %3 {strides = array<i32>} : memref<8x896xbf16, #tpu.memory_space<vmem>>, vector<8x784xbf16>,
    %c0_4 = arith.constant 0 : index
    %c0_5 = arith.constant 0 : index
    %5 = vector.load %arg9[%c0_4, %c0_5] : memref<8x896xbf16, #tpu.memory_space<vmem>>, vector<8x896xbf16>
    %c0_6 = arith.constant 0 : index
    %c0_7 = arith.constant 0 : index
    %6 = vector.load %arg2[%c0_6, %c0_7] : memref<896x128xbf16, #tpu.memory_space<vmem>>, vector<896x128xbf16>
    %cst_8 = arith.constant dense<0.000000e+00> : vector<8x128xf32>
    %7 = tpu.matmul %5, %6, %cst_8 {dimension_numbers = #tpu.dot_dimension_numbers<[1], [0], [0], [1], [0, 0, 1, 1], [], []>} : vector<8x896xbf16>, vector<896x128xbf16>, vector<8x128xf32> -> vector<8x128xf32>
    %c0_9 = arith.constant 0 : index
    %c0_10 = arith.constant 0 : index
    %8 = vector.load %arg3[%c0_9, %c0_10] : memref<1x128xf32, #tpu.memory_space<vmem>>, vector<1x128xf32>
    %9 = vector.broadcast %8 : vector<1x128xf32> to vector<8x128xf32>
    %10 = arith.addf %7, %9 : vector<8x128xf32>
    %cst_11 = arith.constant 0.000000e+00 : f32
    %11 = vector.broadcast %cst_11 : f32 to vector<8x128xf32>
    %12 = arith.maximumf %10, %11 : vector<8x128xf32>
    %13 = arith.truncf %12 : vector<8x128xf32> to vector<8x128xbf16>
    %c0_12 = arith.constant 0 : index
    %c0_13 = arith.constant 0 : index
    %14 = vector.load %arg4[%c0_12, %c0_13] : memref<128x128xbf16, #tpu.memory_space<vmem>>, vector<128x128xbf16>
    %cst_14 = arith.constant dense<0.000000e+00> : vector<8x128xf32>
    %15 = tpu.matmul %13, %14, %cst_14 {dimension_numbers = #tpu.dot_dimension_numbers<[1], [0], [0], [1], [0, 0, 1, 1], [], []>} : vector<8x128xbf16>, vector<128x128xbf16>, vector<8x128xf32> -> vector<8x128xf32>
    %c0_15 = arith.constant 0 : index
    %c0_16 = arith.constant 0 : index
    %16 = vector.load %arg5[%c0_15, %c0_16] : memref<1x128xf32, #tpu.memory_space<vmem>>, vector<1x128xf32>
    %17 = vector.broadcast %16 : vector<1x128xf32> to vector<8x128xf32>
    %18 = arith.addf %15, %17 : vector<8x128xf32>
    %cst_17 = arith.constant 0.000000e+00 : f32
    %19 = vector.broadcast %cst_17 : f32 to vector<8x128xf32>
    %20 = arith.maximumf %18, %19 : vector<8x128xf32>
    %21 = arith.truncf %20 : vector<8x128xf32> to vector<8x128xbf16>
    %c0_18 = arith.constant 0 : index
    %c0_19 = arith.constant 0 : index
    %22 = vector.load %arg6[%c0_18, %c0_19] : memref<128x128xbf16, #tpu.memory_space<vmem>>, vector<128x128xbf16>
    %cst_20 = arith.constant dense<0.000000e+00> : vector<8x128xf32>
    %23 = tpu.matmul %21, %22, %cst_20 {dimension_numbers = #tpu.dot_dimension_numbers<[1], [0], [0], [1], [0, 0, 1, 1], [], []>} : vector<8x128xbf16>, vector<128x128xbf16>, vector<8x128xf32> -> vector<8x128xf32>
    %c0_21 = arith.constant 0 : index
    %c0_22 = arith.constant 0 : index
    %24 = vector.load %arg7[%c0_21, %c0_22] : memref<1x128xf32, #tpu.memory_space<vmem>>, vector<1x128xf32>
    %25 = vector.broadcast %24 : vector<1x128xf32> to vector<8x128xf32>
    %26 = arith.addf %23, %25 : vector<8x128xf32>
    %c0_23 = arith.constant 0 : index
    %c0_24 = arith.constant 0 : index
    %27 = vector.load %arg8[%c0_23, %c0_24] : memref<8x128xf32, #tpu.memory_space<vmem>>, vector<8x128xf32>
    tpu.vector_store %arg8[%c0_23, %c0_24], %26 {strides = array<i32>} : memref<8x128xf32, #tpu.memory_space<vmem>>, vector<8x128xf32>,
    return
  }
  func.func @transform_0(%arg0: i32) -> (i32, i32) {
    %c0_i32 = arith.constant 0 : i32
    %c0_i32_0 = arith.constant 0 : i32
    return %arg0, %c0_i32 : i32, i32
  }
  func.func @transform_1(%arg0: i32) -> (i32, i32) {
    %c0_i32 = arith.constant 0 : i32
    %c0_i32_0 = arith.constant 0 : i32
    %c0_i32_1 = arith.constant 0 : i32
    return %c0_i32, %c0_i32_0 : i32, i32
  }
  func.func @transform_2(%arg0: i32) -> (i32, i32) {
    %c0_i32 = arith.constant 0 : i32
    %c0_i32_0 = arith.constant 0 : i32
    %c0_i32_1 = arith.constant 0 : i32
    return %c0_i32, %c0_i32_0 : i32, i32
  }
  func.func @transform_3(%arg0: i32) -> (i32, i32) {
    %c0_i32 = arith.constant 0 : i32
    %c0_i32_0 = arith.constant 0 : i32
    %c0_i32_1 = arith.constant 0 : i32
    return %c0_i32, %c0_i32_0 : i32, i32
  }
  func.func @transform_4(%arg0: i32) -> (i32, i32) {
    %c0_i32 = arith.constant 0 : i32
    %c0_i32_0 = arith.constant 0 : i32
    %c0_i32_1 = arith.constant 0 : i32
    return %c0_i32, %c0_i32_0 : i32, i32
  }
  func.func @transform_5(%arg0: i32) -> (i32, i32) {
    %c0_i32 = arith.constant 0 : i32
    %c0_i32_0 = arith.constant 0 : i32
    %c0_i32_1 = arith.constant 0 : i32
    return %c0_i32, %c0_i32_0 : i32, i32
  }
  func.func @transform_6(%arg0: i32) -> (i32, i32) {
    %c0_i32 = arith.constant 0 : i32
    %c0_i32_0 = arith.constant 0 : i32
    %c0_i32_1 = arith.constant 0 : i32
    return %c0_i32, %c0_i32_0 : i32, i32
  }
  func.func @transform_7(%arg0: i32) -> (i32, i32) {
    %c0_i32 = arith.constant 0 : i32
    %c0_i32_0 = arith.constant 0 : i32
    return %arg0, %c0_i32 : i32, i32
  }
}

</mosaic_0001>

<llo_original>
// kernel: simple_mlp_forward.1
$region0: #{simple_mlp_forward.1}
  #allocation0 [shape = 'u32[]', space=smem, size = 0x4, offset = 0x4, fixed_abs, tag = 'smem constant byte address 0x4 - core index']
  #allocation1 [shape = 'u32[72,128]{1,0:T(1,128)}', space=vmem, size = 0x9000, scoped, tag = 'internal scratch']
  #allocation2 [shape = 'bf16[8,896]{1,0:T(8,128)(2,1)}', space=vmem, size = 0x3800, scoped, tag = 'scratch operand']
  %s0 = inlined_call_operand.vmem [shape: f32[8,784], index: 0, kind: input, shape index: {}]
  %s1 = inlined_call_operand.vmem [shape: bf16[896,128], index: 1, kind: input, shape index: {}]
  %s2 = inlined_call_operand.vmem [shape: f32[1,128], index: 2, kind: input, shape index: {}]
  %s3 = inlined_call_operand.vmem [shape: bf16[128,128], index: 3, kind: input, shape index: {}]
  %s4 = inlined_call_operand.vmem [shape: f32[1,128], index: 4, kind: input, shape index: {}]
  %s5 = inlined_call_operand.vmem [shape: bf16[128,128], index: 5, kind: input, shape index: {}]
  %s6 = inlined_call_operand.vmem [shape: f32[1,128], index: 6, kind: input, shape index: {}]
  %s7 = inlined_call_operand.hbm [shape: f32[8,128], index: 7, kind: output, shape index: {}]
  %s8 = sld [smem:[#allocation0]]
  $region38: #{simple_mlp_forward.1} parent=0
    _
  %s10 = ssub.s32 1, %s8
  %s11 = scalar_select 0, %s10, %s8
  $region1: #{simple_mlp_forward.1} parent=0
    #allocation3 [shape = 'u8[4096]{0}', space=vmem, size = 0x1000, scoped, tag = 'output window, operand 0, single buffered']
    #allocation4 [shape = 's32[1]{0}', space=sflag, size = 0x4, scoped, tag = 'scoped memory for simple_mlp_forward.1']
    %12 = vsyncpa [#allocation4], 0
    // Predicated region
    $region2: #{simple_mlp_forward.1} parent=1 // pred_check
      _
    $region3: #{simple_mlp_forward.1} parent=1 // pred_check_branch
      %14 = sbr.rel (0) target = $region5
    $region4: #{simple_mlp_forward.1} parent=1 // pred_region
      _
    $region5: #{simple_mlp_forward.1} parent=1 // pred_fallthru
      _
    // Predicated region
    $region6: #{simple_mlp_forward.1} parent=1 // pred_check
      _
    $region7: #{simple_mlp_forward.1} parent=1 // pred_check_branch
      %16 = sbr.rel (0) target = $region9
    $region8: #{simple_mlp_forward.1} parent=1 // pred_region
      _
    $region9: #{simple_mlp_forward.1} parent=1 // pred_fallthru
      _
    // Predicated region
    $region10: #{simple_mlp_forward.1} parent=1 // pred_check
      _
    $region11: #{simple_mlp_forward.1} parent=1 // pred_check_branch
      %18 = sbr.rel (0) target = $region13
    $region12: #{simple_mlp_forward.1} parent=1 // pred_region
      _
    $region13: #{simple_mlp_forward.1} parent=1 // pred_fallthru
      _
    // Predicated region
    $region14: #{simple_mlp_forward.1} parent=1 // pred_check
      _
    $region15: #{simple_mlp_forward.1} parent=1 // pred_check_branch
      %20 = sbr.rel (0) target = $region17
    $region16: #{simple_mlp_forward.1} parent=1 // pred_region
      _
    $region17: #{simple_mlp_forward.1} parent=1 // pred_fallthru
      _
    // Predicated region
    $region18: #{simple_mlp_forward.1} parent=1 // pred_check
      _
    $region19: #{simple_mlp_forward.1} parent=1 // pred_check_branch
      %22 = sbr.rel (0) target = $region21
    $region20: #{simple_mlp_forward.1} parent=1 // pred_region
      _
    $region21: #{simple_mlp_forward.1} parent=1 // pred_fallthru
      _
    // Predicated region
    $region22: #{simple_mlp_forward.1} parent=1 // pred_check
      _
    $region23: #{simple_mlp_forward.1} parent=1 // pred_check_branch
      %24 = sbr.rel (0) target = $region25
    $region24: #{simple_mlp_forward.1} parent=1 // pred_region
      _
    $region25: #{simple_mlp_forward.1} parent=1 // pred_fallthru
      _
    // Predicated region
    $region26: #{simple_mlp_forward.1} parent=1 // pred_check
      _
    $region27: #{simple_mlp_forward.1} parent=1 // pred_check_branch
      %26 = sbr.rel (0) target = $region29
    $region28: #{simple_mlp_forward.1} parent=1 // pred_region
      _
    $region29: #{simple_mlp_forward.1} parent=1 // pred_fallthru
      _
    %28 = vst [vmem:[#allocation2 + $0x18] sm:$0xf] 0
    %v29 = vld [vmem:[%s0] sm:$0xff]
    %v30 = vld [vmem:[%s0 + $0x8] sm:$0xff]
    %v31 = vld [vmem:[%s0 + $0x10] sm:$0xff]
    %v32 = vld [vmem:[%s0 + $0x18] sm:$0xff]
    %v33 = vld [vmem:[%s0 + $0x20] sm:$0xff]
    %v34 = vld [vmem:[%s0 + $0x28] sm:$0xff]
    %v35 = vld [vmem:[%s0 + $0x30] sm:$0xff]
    %v36 = vpack.c.bf16 %v30, %v29
    %v37 = vpack.c.bf16 %v32, %v31
    %v38 = vpack.c.bf16 %v34, %v33
    %v39 = vpack.c.bf16 %v35, %v35
    %40 = vst [vmem:[#allocation2] sm:$0xff] %v36
    %41 = vst [vmem:[#allocation2 + $0x8] sm:$0xff] %v37
    %42 = vst [vmem:[#allocation2 + $0x10] sm:$0xff] %v38
    %vm43 = vcmask 125952
    %44 = vst.msk [vmem:[#allocation2 + $0x18] sm:$0xf] %vm43, %v39
    %v45 = vld [vmem:[#allocation2] sm:$0xff]
    %v46 = vld [vmem:[#allocation2 + $0x8] sm:$0xff]
    %v47 = vld [vmem:[#allocation2 + $0x10] sm:$0xff]
    %v48 = vld [vmem:[#allocation2 + $0x18] sm:$0xf]
    %v49 = vld [vmem:[%s1] sm:$0xf]
    %v50 = vld [vmem:[%s1 + $0x4] sm:$0xf]
    %v51 = vld [vmem:[%s1 + $0x8] sm:$0xf]
    %v52 = vld [vmem:[%s1 + $0xc] sm:$0xf]
    %v53 = vld [vmem:[%s1 + $0x10] sm:$0xf]
    %v54 = vld [vmem:[%s1 + $0x14] sm:$0xf]
    %v55 = vld [vmem:[%s1 + $0x18] sm:$0xf]
    %v56 = vld [vmem:[%s1 + $0x1c] sm:$0xf]
    %v57 = vld [vmem:[%s1 + $0x20] sm:$0xf]
    %v58 = vld [vmem:[%s1 + $0x24] sm:$0xf]
    %v59 = vld [vmem:[%s1 + $0x28] sm:$0xf]
    %v60 = vld [vmem:[%s1 + $0x2c] sm:$0xf]
    %v61 = vld [vmem:[%s1 + $0x30] sm:$0xf]
    %v62 = vld [vmem:[%s1 + $0x34] sm:$0xf]
    %v63 = vld [vmem:[%s1 + $0x38] sm:$0xf]
    %v64 = vld [vmem:[%s1 + $0x3c] sm:$0xf]
    %v65 = vld [vmem:[%s1 + $0x40] sm:$0xf]
    %v66 = vld [vmem:[%s1 + $0x44] sm:$0xf]
    %v67 = vld [vmem:[%s1 + $0x48] sm:$0xf]
    %v68 = vld [vmem:[%s1 + $0x4c] sm:$0xf]
    %v69 = vld [vmem:[%s1 + $0x50] sm:$0xf]
    %v70 = vld [vmem:[%s1 + $0x54] sm:$0xf]
    %v71 = vld [vmem:[%s1 + $0x58] sm:$0xf]
    %v72 = vld [vmem:[%s1 + $0x5c] sm:$0xf]
    %v73 = vld [vmem:[%s1 + $0x60] sm:$0xf]
    %v74 = vld [vmem:[%s1 + $0x64] sm:$0xf]
    %v75 = vld [vmem:[%s1 + $0x68] sm:$0xf]
    %v76 = vld [vmem:[%s1 + $0x6c] sm:$0xf]
    %v77 = vld [vmem:[%s1 + $0x70] sm:$0xf]
    %v78 = vld [vmem:[%s1 + $0x74] sm:$0xf]
    %v79 = vld [vmem:[%s1 + $0x78] sm:$0xf]
    %v80 = vld [vmem:[%s1 + $0x7c] sm:$0xf]
    %v81 = vld [vmem:[%s1 + $0x80] sm:$0xf]
    %v82 = vld [vmem:[%s1 + $0x84] sm:$0xf]
    %v83 = vld [vmem:[%s1 + $0x88] sm:$0xf]
    %v84 = vld [vmem:[%s1 + $0x8c] sm:$0xf]
    %v85 = vld [vmem:[%s1 + $0x90] sm:$0xf]
    %v86 = vld [vmem:[%s1 + $0x94] sm:$0xf]
    %v87 = vld [vmem:[%s1 + $0x98] sm:$0xf]
    %v88 = vld [vmem:[%s1 + $0x9c] sm:$0xf]
    %v89 = vld [vmem:[%s1 + $0xa0] sm:$0xf]
    %v90 = vld [vmem:[%s1 + $0xa4] sm:$0xf]
    %v91 = vld [vmem:[%s1 + $0xa8] sm:$0xf]
    %v92 = vld [vmem:[%s1 + $0xac] sm:$0xf]
    %v93 = vld [vmem:[%s1 + $0xb0] sm:$0xf]
    %v94 = vld [vmem:[%s1 + $0xb4] sm:$0xf]
    %v95 = vld [vmem:[%s1 + $0xb8] sm:$0xf]
    %v96 = vld [vmem:[%s1 + $0xbc] sm:$0xf]
    %v97 = vld [vmem:[%s1 + $0xc0] sm:$0xf]
    %v98 = vld [vmem:[%s1 + $0xc4] sm:$0xf]
    %v99 = vld [vmem:[%s1 + $0xc8] sm:$0xf]
    %v100 = vld [vmem:[%s1 + $0xcc] sm:$0xf]
    %v101 = vld [vmem:[%s1 + $0xd0] sm:$0xf]
    %v102 = vld [vmem:[%s1 + $0xd4] sm:$0xf]
    %v103 = vld [vmem:[%s1 + $0xd8] sm:$0xf]
    %v104 = vld [vmem:[%s1 + $0xdc] sm:$0xf]
    %v105 = vld [vmem:[%s1 + $0xe0] sm:$0xf]
    %v106 = vld [vmem:[%s1 + $0xe4] sm:$0xf]
    %v107 = vld [vmem:[%s1 + $0xe8] sm:$0xf]
    %v108 = vld [vmem:[%s1 + $0xec] sm:$0xf]
    %v109 = vld [vmem:[%s1 + $0xf0] sm:$0xf]
    %v110 = vld [vmem:[%s1 + $0xf4] sm:$0xf]
    %v111 = vld [vmem:[%s1 + $0xf8] sm:$0xf]
    %v112 = vld [vmem:[%s1 + $0xfc] sm:$0xf]
    %v113 = vld [vmem:[%s1 + $0x100] sm:$0xf]
    %v114 = vld [vmem:[%s1 + $0x104] sm:$0xf]
    %v115 = vld [vmem:[%s1 + $0x108] sm:$0xf]
    %v116 = vld [vmem:[%s1 + $0x10c] sm:$0xf]
    %v117 = vld [vmem:[%s1 + $0x110] sm:$0xf]
    %v118 = vld [vmem:[%s1 + $0x114] sm:$0xf]
    %v119 = vld [vmem:[%s1 + $0x118] sm:$0xf]
    %v120 = vld [vmem:[%s1 + $0x11c] sm:$0xf]
    %v121 = vld [vmem:[%s1 + $0x120] sm:$0xf]
    %v122 = vld [vmem:[%s1 + $0x124] sm:$0xf]
    %v123 = vld [vmem:[%s1 + $0x128] sm:$0xf]
    %v124 = vld [vmem:[%s1 + $0x12c] sm:$0xf]
    %v125 = vld [vmem:[%s1 + $0x130] sm:$0xf]
    %v126 = vld [vmem:[%s1 + $0x134] sm:$0xf]
    %v127 = vld [vmem:[%s1 + $0x138] sm:$0xf]
    %v128 = vld [vmem:[%s1 + $0x13c] sm:$0xf]
    %v129 = vld [vmem:[%s1 + $0x140] sm:$0xf]
    %v130 = vld [vmem:[%s1 + $0x144] sm:$0xf]
    %v131 = vld [vmem:[%s1 + $0x148] sm:$0xf]
    %v132 = vld [vmem:[%s1 + $0x14c] sm:$0xf]
    %v133 = vld [vmem:[%s1 + $0x150] sm:$0xf]
    %v134 = vld [vmem:[%s1 + $0x154] sm:$0xf]
    %v135 = vld [vmem:[%s1 + $0x158] sm:$0xf]
    %v136 = vld [vmem:[%s1 + $0x15c] sm:$0xf]
    %v137 = vld [vmem:[%s1 + $0x160] sm:$0xf]
    %v138 = vld [vmem:[%s1 + $0x164] sm:$0xf]
    %v139 = vld [vmem:[%s1 + $0x168] sm:$0xf]
    %v140 = vld [vmem:[%s1 + $0x16c] sm:$0xf]
    %v141 = vld [vmem:[%s1 + $0x170] sm:$0xf]
    %v142 = vld [vmem:[%s1 + $0x174] sm:$0xf]
    %v143 = vld [vmem:[%s1 + $0x178] sm:$0xf]
    %v144 = vld [vmem:[%s1 + $0x17c] sm:$0xf]
    %v145 = vld [vmem:[%s1 + $0x180] sm:$0xf]
    %v146 = vld [vmem:[%s1 + $0x184] sm:$0xf]
    %v147 = vld [vmem:[%s1 + $0x188] sm:$0xf]
    %v148 = vld [vmem:[%s1 + $0x18c] sm:$0xf]
    %v149 = vld [vmem:[%s1 + $0x190] sm:$0xf]
    %v150 = vld [vmem:[%s1 + $0x194] sm:$0xf]
    %v151 = vld [vmem:[%s1 + $0x198] sm:$0xf]
    %v152 = vld [vmem:[%s1 + $0x19c] sm:$0xf]
    %v153 = vld [vmem:[%s1 + $0x1a0] sm:$0xf]
    %v154 = vld [vmem:[%s1 + $0x1a4] sm:$0xf]
    %v155 = vld [vmem:[%s1 + $0x1a8] sm:$0xf]
    %v156 = vld [vmem:[%s1 + $0x1ac] sm:$0xf]
    %v157 = vld [vmem:[%s1 + $0x1b0] sm:$0xf]
    %v158 = vld [vmem:[%s1 + $0x1b4] sm:$0xf]
    %v159 = vld [vmem:[%s1 + $0x1b8] sm:$0xf]
    %v160 = vld [vmem:[%s1 + $0x1bc] sm:$0xf]
    %v161 = vld [vmem:[%s2] sm:$0x1]
    %v163 = vperm.slane %v161, 0
    %v169 = vunpack.c.l.b16 %v45
    %v170 = vunpack.c.h.b16 %v45
    %v171 = vunpack.c.l.b16 %v46
    %v172 = vunpack.c.h.b16 %v46
    %v173 = vunpack.c.l.b16 %v47
    %v174 = vunpack.c.h.b16 %v47
    %v175 = vunpack.c.l.b16 %v48
    %v176 = vpack.c.b16 %v169, %v169
    %v177 = vpack.c.b16 %v170, %v170
    %v178 = vpack.c.b16 %v171, %v171
    %v179 = vpack.c.b16 %v172, %v172
    %v180 = vpack.c.b16 %v173, %v173
    %v181 = vpack.c.b16 %v174, %v174
    %v182 = vpack.c.b16 %v175, %v175
    %v302 = vunpack.c.l.b16 %v49
    %v303 = vunpack.c.l.b16 %v50
    %v304 = vunpack.c.l.b16 %v51
    %v305 = vunpack.c.l.b16 %v52
    %v306 = vunpack.c.l.b16 %v53
    %v307 = vunpack.c.l.b16 %v54
    %v308 = vunpack.c.l.b16 %v55
    %v309 = vunpack.c.l.b16 %v56
    %v310 = vunpack.c.l.b16 %v57
    %v311 = vunpack.c.l.b16 %v58
    %v312 = vunpack.c.l.b16 %v59
    %v313 = vunpack.c.l.b16 %v60
    %v314 = vunpack.c.l.b16 %v61
    %v315 = vunpack.c.l.b16 %v62
    %v316 = vunpack.c.l.b16 %v63
    %v317 = vunpack.c.l.b16 %v64
    %v318 = vunpack.c.l.b16 %v65
    %v319 = vunpack.c.l.b16 %v66
    %v320 = vunpack.c.l.b16 %v67
    %v321 = vunpack.c.l.b16 %v68
    %v322 = vunpack.c.l.b16 %v69
    %v323 = vunpack.c.l.b16 %v70
    %v324 = vunpack.c.l.b16 %v71
    %v325 = vunpack.c.l.b16 %v72
    %v326 = vunpack.c.l.b16 %v73
    %v327 = vunpack.c.l.b16 %v74
    %v328 = vunpack.c.l.b16 %v75
    %v329 = vunpack.c.l.b16 %v76
    %v330 = vunpack.c.l.b16 %v77
    %v331 = vunpack.c.l.b16 %v78
    %v332 = vunpack.c.l.b16 %v79
    %v333 = vunpack.c.l.b16 %v80
    %v334 = vunpack.c.l.b16 %v81
    %v335 = vunpack.c.l.b16 %v82
    %v336 = vunpack.c.l.b16 %v83
    %v337 = vunpack.c.l.b16 %v84
    %v338 = vunpack.c.l.b16 %v85
    %v339 = vunpack.c.l.b16 %v86
    %v340 = vunpack.c.l.b16 %v87
    %v341 = vunpack.c.l.b16 %v88
    %v342 = vunpack.c.l.b16 %v89
    %v343 = vunpack.c.l.b16 %v90
    %v344 = vunpack.c.l.b16 %v91
    %v345 = vunpack.c.l.b16 %v92
    %v346 = vunpack.c.l.b16 %v93
    %v347 = vunpack.c.l.b16 %v94
    %v348 = vunpack.c.l.b16 %v95
    %v349 = vunpack.c.l.b16 %v96
    %v350 = vunpack.c.l.b16 %v97
    %v351 = vunpack.c.l.b16 %v98
    %v352 = vunpack.c.l.b16 %v99
    %v353 = vunpack.c.l.b16 %v100
    %v354 = vunpack.c.l.b16 %v101
    %v355 = vunpack.c.l.b16 %v102
    %v356 = vunpack.c.l.b16 %v103
    %v357 = vunpack.c.l.b16 %v104
    %v358 = vunpack.c.l.b16 %v105
    %v359 = vunpack.c.l.b16 %v106
    %v360 = vunpack.c.l.b16 %v107
    %v361 = vunpack.c.l.b16 %v108
    %v362 = vunpack.c.l.b16 %v109
    %v363 = vunpack.c.l.b16 %v110
    %v364 = vunpack.c.l.b16 %v111
    %v365 = vunpack.c.l.b16 %v112
    %v366 = vunpack.c.l.b16 %v113
    %v367 = vunpack.c.l.b16 %v114
    %v368 = vunpack.c.l.b16 %v115
    %v369 = vunpack.c.l.b16 %v116
    %v370 = vunpack.c.l.b16 %v117
    %v371 = vunpack.c.l.b16 %v118
    %v372 = vunpack.c.l.b16 %v119
    %v373 = vunpack.c.l.b16 %v120
    %v374 = vunpack.c.l.b16 %v121
    %v375 = vunpack.c.l.b16 %v122
    %v376 = vunpack.c.l.b16 %v123
    %v377 = vunpack.c.l.b16 %v124
    %v378 = vunpack.c.l.b16 %v125
    %v379 = vunpack.c.l.b16 %v126
    %v380 = vunpack.c.l.b16 %v127
    %v381 = vunpack.c.l.b16 %v128
    %v382 = vunpack.c.l.b16 %v129
    %v383 = vunpack.c.l.b16 %v130
    %v384 = vunpack.c.l.b16 %v131
    %v385 = vunpack.c.l.b16 %v132
    %v386 = vunpack.c.l.b16 %v133
    %v387 = vunpack.c.l.b16 %v134
    %v388 = vunpack.c.l.b16 %v135
    %v389 = vunpack.c.l.b16 %v136
    %v390 = vunpack.c.l.b16 %v137
    %v391 = vunpack.c.l.b16 %v138
    %v392 = vunpack.c.l.b16 %v139
    %v393 = vunpack.c.l.b16 %v140
    %v394 = vunpack.c.l.b16 %v141
    %v395 = vunpack.c.l.b16 %v142
    %v396 = vunpack.c.l.b16 %v143
    %v397 = vunpack.c.l.b16 %v144
    %v398 = vunpack.c.l.b16 %v145
    %v399 = vunpack.c.l.b16 %v146
    %v400 = vunpack.c.l.b16 %v147
    %v401 = vunpack.c.l.b16 %v148
    %v402 = vunpack.c.l.b16 %v149
    %v403 = vunpack.c.l.b16 %v150
    %v404 = vunpack.c.l.b16 %v151
    %v405 = vunpack.c.l.b16 %v152
    %v406 = vunpack.c.l.b16 %v153
    %v407 = vunpack.c.l.b16 %v154
    %v408 = vunpack.c.l.b16 %v155
    %v409 = vunpack.c.l.b16 %v156
    %v410 = vunpack.c.l.b16 %v157
    %v411 = vunpack.c.l.b16 %v158
    %v412 = vunpack.c.l.b16 %v159
    %v413 = vunpack.c.l.b16 %v160
    %v414 = vpack.c.b16 %v303, %v302
    %v415 = vpack.c.b16 %v305, %v304
    %v416 = vpack.c.b16 %v307, %v306
    %v417 = vpack.c.b16 %v309, %v308
    %v418 = vpack.c.b16 %v311, %v310
    %v419 = vpack.c.b16 %v313, %v312
    %v420 = vpack.c.b16 %v315, %v314
    %v421 = vpack.c.b16 %v317, %v316
    %v422 = vpack.c.b16 %v319, %v318
    %v423 = vpack.c.b16 %v321, %v320
    %v424 = vpack.c.b16 %v323, %v322
    %v425 = vpack.c.b16 %v325, %v324
    %v426 = vpack.c.b16 %v327, %v326
    %v427 = vpack.c.b16 %v329, %v328
    %v428 = vpack.c.b16 %v331, %v330
    %v429 = vpack.c.b16 %v333, %v332
    %v430 = vpack.c.b16 %v335, %v334
    %v431 = vpack.c.b16 %v337, %v336
    %v432 = vpack.c.b16 %v339, %v338
    %v433 = vpack.c.b16 %v341, %v340
    %v434 = vpack.c.b16 %v343, %v342
    %v435 = vpack.c.b16 %v345, %v344
    %v436 = vpack.c.b16 %v347, %v346
    %v437 = vpack.c.b16 %v349, %v348
    %v438 = vpack.c.b16 %v351, %v350
    %v439 = vpack.c.b16 %v353, %v352
    %v440 = vpack.c.b16 %v355, %v354
    %v441 = vpack.c.b16 %v357, %v356
    %v442 = vpack.c.b16 %v359, %v358
    %v443 = vpack.c.b16 %v361, %v360
    %v444 = vpack.c.b16 %v363, %v362
    %v445 = vpack.c.b16 %v365, %v364
    %v446 = vpack.c.b16 %v367, %v366
    %v447 = vpack.c.b16 %v369, %v368
    %v448 = vpack.c.b16 %v371, %v370
    %v449 = vpack.c.b16 %v373, %v372
    %v450 = vpack.c.b16 %v375, %v374
    %v451 = vpack.c.b16 %v377, %v376
    %v452 = vpack.c.b16 %v379, %v378
    %v453 = vpack.c.b16 %v381, %v380
    %v454 = vpack.c.b16 %v383, %v382
    %v455 = vpack.c.b16 %v385, %v384
    %v456 = vpack.c.b16 %v387, %v386
    %v457 = vpack.c.b16 %v389, %v388
    %v458 = vpack.c.b16 %v391, %v390
    %v459 = vpack.c.b16 %v393, %v392
    %v460 = vpack.c.b16 %v395, %v394
    %v461 = vpack.c.b16 %v397, %v396
    %v462 = vpack.c.b16 %v399, %v398
    %v463 = vpack.c.b16 %v401, %v400
    %v464 = vpack.c.b16 %v403, %v402
    %v465 = vpack.c.b16 %v405, %v404
    %v466 = vpack.c.b16 %v407, %v406
    %v467 = vpack.c.b16 %v409, %v408
    %v468 = vpack.c.b16 %v411, %v410
    %v469 = vpack.c.b16 %v413, %v412
    %526 = vmatpush.bf16.msra.mxu0 %v421
    %527 = vmatpush.bf16.msra.mxu0 %v420
    %528 = vmatpush.bf16.msra.mxu0 %v419
    %529 = vmatpush.bf16.msra.mxu0 %v418
    %530 = vmatpush.bf16.msra.mxu0 %v417
    %531 = vmatpush.bf16.msra.mxu0 %v416
    %532 = vmatpush.bf16.msra.mxu0 %v415
    %533 = vmatpush.bf16.msra.mxu0 %v414
    %534 = vmatmul.bf16.gmra.mxu0 %v176
    %v535 = vpop.f32.mrf.mxu0
    %v536 = vadd.f32 %v163, %v535
    %v537 = vpop.f32.mrf.mxu0
    %538 = vdwg.mxu0
    %539 = vmatpush.bf16.msra.mxu0 %v429
    %540 = vmatpush.bf16.msra.mxu0 %v428
    %541 = vmatpush.bf16.msra.mxu0 %v427
    %542 = vmatpush.bf16.msra.mxu0 %v426
    %543 = vmatpush.bf16.msra.mxu0 %v425
    %544 = vmatpush.bf16.msra.mxu0 %v424
    %545 = vmatpush.bf16.msra.mxu0 %v423
    %546 = vmatpush.bf16.msra.mxu0 %v422
    %547 = vmatmul.bf16.gmra.mxu0 %v177
    %v548 = vpop.f32.mrf.mxu0
    %v549 = vadd.f32 %v536, %v548
    %v550 = vpop.f32.mrf.mxu0
    %551 = vdwg.mxu0
    %552 = vmatpush.bf16.msra.mxu0 %v437
    %553 = vmatpush.bf16.msra.mxu0 %v436
    %554 = vmatpush.bf16.msra.mxu0 %v435
    %555 = vmatpush.bf16.msra.mxu0 %v434
    %556 = vmatpush.bf16.msra.mxu0 %v433
    %557 = vmatpush.bf16.msra.mxu0 %v432
    %558 = vmatpush.bf16.msra.mxu0 %v431
    %559 = vmatpush.bf16.msra.mxu0 %v430
    %560 = vmatmul.bf16.gmra.mxu0 %v178
    %v561 = vpop.f32.mrf.mxu0
    %v562 = vadd.f32 %v549, %v561
    %v563 = vpop.f32.mrf.mxu0
    %564 = vdwg.mxu0
    %565 = vmatpush.bf16.msra.mxu0 %v445
    %566 = vmatpush.bf16.msra.mxu0 %v444
    %567 = vmatpush.bf16.msra.mxu0 %v443
    %568 = vmatpush.bf16.msra.mxu0 %v442
    %569 = vmatpush.bf16.msra.mxu0 %v441
    %570 = vmatpush.bf16.msra.mxu0 %v440
    %571 = vmatpush.bf16.msra.mxu0 %v439
    %572 = vmatpush.bf16.msra.mxu0 %v438
    %573 = vmatmul.bf16.gmra.mxu0 %v179
    %v574 = vpop.f32.mrf.mxu0
    %v575 = vadd.f32 %v562, %v574
    %v576 = vpop.f32.mrf.mxu0
    %577 = vdwg.mxu0
    %578 = vmatpush.bf16.msra.mxu0 %v453
    %579 = vmatpush.bf16.msra.mxu0 %v452
    %580 = vmatpush.bf16.msra.mxu0 %v451
    %581 = vmatpush.bf16.msra.mxu0 %v450
    %582 = vmatpush.bf16.msra.mxu0 %v449
    %583 = vmatpush.bf16.msra.mxu0 %v448
    %584 = vmatpush.bf16.msra.mxu0 %v447
    %585 = vmatpush.bf16.msra.mxu0 %v446
    %586 = vmatmul.bf16.gmra.mxu0 %v180
    %v587 = vpop.f32.mrf.mxu0
    %v588 = vadd.f32 %v575, %v587
    %v589 = vpop.f32.mrf.mxu0
    %590 = vdwg.mxu0
    %591 = vmatpush.bf16.msra.mxu0 %v461
    %592 = vmatpush.bf16.msra.mxu0 %v460
    %593 = vmatpush.bf16.msra.mxu0 %v459
    %594 = vmatpush.bf16.msra.mxu0 %v458
    %595 = vmatpush.bf16.msra.mxu0 %v457
    %596 = vmatpush.bf16.msra.mxu0 %v456
    %597 = vmatpush.bf16.msra.mxu0 %v455
    %598 = vmatpush.bf16.msra.mxu0 %v454
    %599 = vmatmul.bf16.gmra.mxu0 %v181
    %v600 = vpop.f32.mrf.mxu0
    %v601 = vadd.f32 %v588, %v600
    %v602 = vpop.f32.mrf.mxu0
    %603 = vdwg.mxu0
    %604 = vmatpush.bf16.msra.mxu0 %v469
    %605 = vmatpush.bf16.msra.mxu0 %v468
    %606 = vmatpush.bf16.msra.mxu0 %v467
    %607 = vmatpush.bf16.msra.mxu0 %v466
    %608 = vmatpush.bf16.msra.mxu0 %v465
    %609 = vmatpush.bf16.msra.mxu0 %v464
    %610 = vmatpush.bf16.msra.mxu0 %v463
    %611 = vmatpush.bf16.msra.mxu0 %v462
    %612 = vmatmul.bf16.gmra.mxu0 %v182
    %v613 = vpop.f32.mrf.mxu0
    %v614 = vadd.f32 %v601, %v613
    %v615 = vpop.f32.mrf.mxu0
    %616 = vdwg.mxu0
    %v617 = vmax.f32 %v614, 0.0
    %v618 = vpack.c.bf16 %v617, %v617
    %v619 = vld [vmem:[%s3] sm:$0xf]
    %v620 = vld [vmem:[%s3 + $0x4] sm:$0xf]
    %v621 = vld [vmem:[%s3 + $0x8] sm:$0xf]
    %v622 = vld [vmem:[%s3 + $0xc] sm:$0xf]
    %v623 = vld [vmem:[%s3 + $0x10] sm:$0xf]
    %v624 = vld [vmem:[%s3 + $0x14] sm:$0xf]
    %v625 = vld [vmem:[%s3 + $0x18] sm:$0xf]
    %v626 = vld [vmem:[%s3 + $0x1c] sm:$0xf]
    %v627 = vld [vmem:[%s3 + $0x20] sm:$0xf]
    %v628 = vld [vmem:[%s3 + $0x24] sm:$0xf]
    %v629 = vld [vmem:[%s3 + $0x28] sm:$0xf]
    %v630 = vld [vmem:[%s3 + $0x2c] sm:$0xf]
    %v631 = vld [vmem:[%s3 + $0x30] sm:$0xf]
    %v632 = vld [vmem:[%s3 + $0x34] sm:$0xf]
    %v633 = vld [vmem:[%s3 + $0x38] sm:$0xf]
    %v634 = vld [vmem:[%s3 + $0x3c] sm:$0xf]
    %v635 = vld [vmem:[%s4] sm:$0x1]
    %v637 = vperm.slane %v635, 0
    %v655 = vunpack.c.l.b16 %v619
    %v656 = vunpack.c.l.b16 %v620
    %v657 = vunpack.c.l.b16 %v621
    %v658 = vunpack.c.l.b16 %v622
    %v659 = vunpack.c.l.b16 %v623
    %v660 = vunpack.c.l.b16 %v624
    %v661 = vunpack.c.l.b16 %v625
    %v662 = vunpack.c.l.b16 %v626
    %v663 = vunpack.c.l.b16 %v627
    %v664 = vunpack.c.l.b16 %v628
    %v665 = vunpack.c.l.b16 %v629
    %v666 = vunpack.c.l.b16 %v630
    %v667 = vunpack.c.l.b16 %v631
    %v668 = vunpack.c.l.b16 %v632
    %v669 = vunpack.c.l.b16 %v633
    %v670 = vunpack.c.l.b16 %v634
    %v671 = vpack.c.b16 %v656, %v655
    %v672 = vpack.c.b16 %v658, %v657
    %v673 = vpack.c.b16 %v660, %v659
    %v674 = vpack.c.b16 %v662, %v661
    %v675 = vpack.c.b16 %v664, %v663
    %v676 = vpack.c.b16 %v666, %v665
    %v677 = vpack.c.b16 %v668, %v667
    %v678 = vpack.c.b16 %v670, %v669
    %687 = vmatpush.bf16.msra.mxu0 %v678
    %688 = vmatpush.bf16.msra.mxu0 %v677
    %689 = vmatpush.bf16.msra.mxu0 %v676
    %690 = vmatpush.bf16.msra.mxu0 %v675
    %691 = vmatpush.bf16.msra.mxu0 %v674
    %692 = vmatpush.bf16.msra.mxu0 %v673
    %693 = vmatpush.bf16.msra.mxu0 %v672
    %694 = vmatpush.bf16.msra.mxu0 %v671
    %695 = vmatmul.bf16.gmra.mxu0 %v618
    %v696 = vpop.f32.mrf.mxu0
    %v697 = vadd.f32 %v637, %v696
    %v698 = vpop.f32.mrf.mxu0
    %699 = vdwg.mxu0
    %v700 = vmax.f32 %v697, 0.0
    %v701 = vpack.c.bf16 %v700, %v700
    %v702 = vld [vmem:[%s5] sm:$0xf]
    %v703 = vld [vmem:[%s5 + $0x4] sm:$0xf]
    %v704 = vld [vmem:[%s5 + $0x8] sm:$0xf]
    %v705 = vld [vmem:[%s5 + $0xc] sm:$0xf]
    %v706 = vld [vmem:[%s5 + $0x10] sm:$0xf]
    %v707 = vld [vmem:[%s5 + $0x14] sm:$0xf]
    %v708 = vld [vmem:[%s5 + $0x18] sm:$0xf]
    %v709 = vld [vmem:[%s5 + $0x1c] sm:$0xf]
    %v710 = vld [vmem:[%s5 + $0x20] sm:$0xf]
    %v711 = vld [vmem:[%s5 + $0x24] sm:$0xf]
    %v712 = vld [vmem:[%s5 + $0x28] sm:$0xf]
    %v713 = vld [vmem:[%s5 + $0x2c] sm:$0xf]
    %v714 = vld [vmem:[%s5 + $0x30] sm:$0xf]
    %v715 = vld [vmem:[%s5 + $0x34] sm:$0xf]
    %v716 = vld [vmem:[%s5 + $0x38] sm:$0xf]
    %v717 = vld [vmem:[%s5 + $0x3c] sm:$0xf]
    %v718 = vld [vmem:[%s6] sm:$0x1]
    %v720 = vperm.slane %v718, 0
    %v738 = vunpack.c.l.b16 %v702
    %v739 = vunpack.c.l.b16 %v703
    %v740 = vunpack.c.l.b16 %v704
    %v741 = vunpack.c.l.b16 %v705
    %v742 = vunpack.c.l.b16 %v706
    %v743 = vunpack.c.l.b16 %v707
    %v744 = vunpack.c.l.b16 %v708
    %v745 = vunpack.c.l.b16 %v709
    %v746 = vunpack.c.l.b16 %v710
    %v747 = vunpack.c.l.b16 %v711
    %v748 = vunpack.c.l.b16 %v712
    %v749 = vunpack.c.l.b16 %v713
    %v750 = vunpack.c.l.b16 %v714
    %v751 = vunpack.c.l.b16 %v715
    %v752 = vunpack.c.l.b16 %v716
    %v753 = vunpack.c.l.b16 %v717
    %v754 = vpack.c.b16 %v739, %v738
    %v755 = vpack.c.b16 %v741, %v740
    %v756 = vpack.c.b16 %v743, %v742
    %v757 = vpack.c.b16 %v745, %v744
    %v758 = vpack.c.b16 %v747, %v746
    %v759 = vpack.c.b16 %v749, %v748
    %v760 = vpack.c.b16 %v751, %v750
    %v761 = vpack.c.b16 %v753, %v752
    %770 = vmatpush.bf16.msra.mxu0 %v761
    %771 = vmatpush.bf16.msra.mxu0 %v760
    %772 = vmatpush.bf16.msra.mxu0 %v759
    %773 = vmatpush.bf16.msra.mxu0 %v758
    %774 = vmatpush.bf16.msra.mxu0 %v757
    %775 = vmatpush.bf16.msra.mxu0 %v756
    %776 = vmatpush.bf16.msra.mxu0 %v755
    %777 = vmatpush.bf16.msra.mxu0 %v754
    %778 = vmatmul.bf16.gmra.mxu0 %v701
    %v779 = vpop.f32.mrf.mxu0
    %v780 = vadd.f32 %v720, %v779
    %v781 = vpop.f32.mrf.mxu0
    %782 = vdwg.mxu0
    %783 = vst [vmem:[#allocation3] sm:$0xff] %v780
    // Predicated region
    $region30: #{simple_mlp_forward.1} parent=1 // pred_check
      _
    $region31: #{simple_mlp_forward.1} parent=1 // pred_check_branch
      %785 = sbr.rel (0) target = $region33
    $region32: #{simple_mlp_forward.1} parent=1 // pred_region
      %787 = vsyncadd [#allocation4], 0
      %s789 = sshll.u32 [#allocation3], 4
      %s790 = int_to_ptr.vmem [resolvable:$true] %s789
      %s791 = sshll.u32 %s7, 4
      %s792 = int_to_ptr.hbm [resolvable:$true] %s791
      %794 = dma.vmem_to_hbm [thread:$0]  %s790, 128, %s792, [#allocation4]
    $region33: #{simple_mlp_forward.1} parent=1 // pred_fallthru
      _
    // Predicated region
    $region34: #{simple_mlp_forward.1} parent=1 // pred_check
      _
    $region35: #{simple_mlp_forward.1} parent=1 // pred_check_branch
      %796 = sbr.rel (0) target = $region37
    $region36: #{simple_mlp_forward.1} parent=1 // pred_region
      %798 = dma.done [#allocation4], 128
    $region37: #{simple_mlp_forward.1} parent=1 // pred_fallthru
      _
    %799 = vsyncpa [#allocation4], 1

</llo_original>
